<compile_context>
chip_gen: v5e
topology: v5e:2x2
jax: 0.10.0
libtpu: 0.0.40
codegen_flags: <defaults>
</compile_context>

<pallas_src>
import jax
import jax.numpy as jnp
from jax.experimental import pallas as pl
from jax.experimental.pallas import tpu as pltpu

BN_EPS = 1e-5  # PyTorch BatchNorm2d default


def _conv_bn_kernel(x_ref, w_ref, scale_ref, shift_ref, o_ref):
    """One (batch, hw-tile) step: y = W @ x_tile, then fused BN affine.

    x_ref:     (C_in, hw_tile)   input pixels, channels on sublanes, pixels on lanes
    w_ref:     (C_out, C_in)     resident 1x1-conv weight
    scale_ref: (C_out, 1)        resident fused BN scale  (broadcast over lanes)
    shift_ref: (C_out, 1)        resident fused BN shift
    o_ref:     (C_out, hw_tile)  output tile (lane-dense when hw_tile % 128 == 0)
    """
    y = jnp.dot(w_ref[...], x_ref[...], preferred_element_type=jnp.float32)
    o_ref[...] = y * scale_ref[...] + shift_ref[...]


def mapping_forward(x, conv_w, gamma, beta, *, eps=BN_EPS, hw_tile_target=2048):
    """x:(N,C_in,H,W) f32, conv_w:(C_out,C_in,1,1), gamma/beta:(C_out,).

    Returns (N, C_out, H, W) matching Conv2d(1x1, bias=False) + train-mode BatchNorm2d.
    """
    n, c_in, h, w = x.shape
    c_out = conv_w.shape[0]
    hw = h * w
    r = n * hw

    x3 = x.astype(jnp.float32).reshape(n, c_in, hw)          # free reshape, stays NCHW
    w2 = conv_w.reshape(c_out, c_in).astype(jnp.float32)     # (C_out, C_in)

    # ---- BN batch statistics from the input side (tiny C_in x C_in problem, XLA) ----
    mean_x = jnp.mean(x3, axis=(0, 2))                                 # (C_in,)
    xc = x3 - mean_x[None, :, None]
    gram_c = jnp.einsum('ncp,ndp->cd', xc, xc)                         # (C_in, C_in), centered
    mean_y = w2 @ mean_x                                               # (C_out,)
    var_y = jnp.einsum('oc,cd,od->o', w2, gram_c, w2) / r              # biased (train-mode) var
    scale_v = gamma.astype(jnp.float32) * jax.lax.rsqrt(var_y + eps)   # (C_out,)
    shift_v = beta.astype(jnp.float32) - mean_y * scale_v
    scale = scale_v.reshape(c_out, 1)
    shift = shift_v.reshape(c_out, 1)

    # ---- tiling over (N, HW tiles); pad HW only if multiple tiles don't divide evenly ----
    hw_tile = min(hw, hw_tile_target)
    num_hw_tiles = pl.cdiv(hw, hw_tile)
    hw_pad = num_hw_tiles * hw_tile
    x3k = x3 if hw_pad == hw else jnp.pad(x3, ((0, 0), (0, 0), (0, hw_pad - hw)))

    out3 = pl.pallas_call(
        _conv_bn_kernel,
        out_shape=jax.ShapeDtypeStruct((n, c_out, hw_pad), jnp.float32),
        grid=(n, num_hw_tiles),
        in_specs=[
            pl.BlockSpec((None, c_in, hw_tile), lambda b, j: (b, 0, j)),  # x tile
            pl.BlockSpec((c_out, c_in), lambda b, j: (0, 0)),             # weight (resident)
            pl.BlockSpec((c_out, 1), lambda b, j: (0, 0)),                # scale  (resident)
            pl.BlockSpec((c_out, 1), lambda b, j: (0, 0)),                # shift  (resident)
        ],
        out_specs=pl.BlockSpec((None, c_out, hw_tile), lambda b, j: (b, 0, j)),
        compiler_params=pltpu.CompilerParams(
            dimension_semantics=("parallel", "parallel")),
    )(x3k, w2, scale, shift)

    if hw_pad != hw:
        out3 = out3[:, :, :hw]
    return out3.reshape(n, c_out, h, w)


def mapping_reference(x, conv_w, gamma, beta, eps=BN_EPS):
    """Pure-JAX reference mirroring the PyTorch forward (train-mode BatchNorm2d)."""
    w2 = conv_w.reshape(conv_w.shape[0], conv_w.shape[1])
    y = jnp.einsum('nchw,oc->nohw', x, w2)
    mean = y.mean(axis=(0, 2, 3), keepdims=True)
    var = ((y - mean) ** 2).mean(axis=(0, 2, 3), keepdims=True)
    return ((y - mean) * jax.lax.rsqrt(var + eps)
            * gamma[None, :, None, None] + beta[None, :, None, None])


if __name__ == "__main__":
    # Small, deterministic shapes implied by the module: batch=2, C_in=4,
    # spatial=16x16; C_out=128 so the (C_out, hw) output tile is well shaped.
    N, C_IN, H, W = 2, 4, 16, 16
    C_OUT = 128

    key = jax.random.PRNGKey(0)
    kx, kw, kg, kb = jax.random.split(key, 4)

    x = jax.random.normal(kx, (N, C_IN, H, W), jnp.float32)
    conv_w = jax.random.normal(kw, (C_OUT, C_IN, 1, 1), jnp.float32) * 0.2  # Conv2d weight, bias=False
    gamma = 1.0 + 0.1 * jax.random.normal(kg, (C_OUT,), jnp.float32)        # BN weight
    beta = 0.1 * jax.random.normal(kb, (C_OUT,), jnp.float32)               # BN bias

    out = mapping_forward(x, conv_w, gamma, beta)
    out = jax.block_until_ready(out)

    ref = mapping_reference(x, conv_w, gamma, beta)
    assert out.shape == (N, C_OUT, H, W), out.shape
    assert jnp.allclose(out, ref, rtol=1e-3, atol=1e-3), \
        f"max abs err {jnp.max(jnp.abs(out - ref))}"

    print("KERNEL_OK")
</pallas_src>

<mosaic_0001>
module attributes {stable_mosaic.version = 11 : i64} {
  func.func @_conv_bn_kernel(%arg0: i32, %arg1: i32, %arg2: memref<1x4x256xf32, #tpu.memory_space<vmem>>, %arg3: memref<128x4xf32, #tpu.memory_space<vmem>>, %arg4: memref<128x1xf32, #tpu.memory_space<vmem>>, %arg5: memref<128x1xf32, #tpu.memory_space<vmem>>, %arg6: memref<1x128x256xf32, #tpu.memory_space<vmem>>) attributes {dimension_semantics = [#tpu.dimension_semantics<parallel>, #tpu.dimension_semantics<parallel>], iteration_bounds = array<i64: 2, 1>, scalar_prefetch = 0 : i64, scratch_operands = 0 : i64, tpu.core_type = #tpu.core_type<tc>, window_params = [{transform_indices = @transform_0, window_bounds = array<i64: 1, 4, 256>}, {pipeline_mode = #tpu.pipeline_mode<synchronous>, transform_indices = @transform_1, window_bounds = array<i64: 128, 4>}, {pipeline_mode = #tpu.pipeline_mode<synchronous>, transform_indices = @transform_2, window_bounds = array<i64: 128, 1>}, {pipeline_mode = #tpu.pipeline_mode<synchronous>, transform_indices = @transform_3, window_bounds = array<i64: 128, 1>}, {transform_indices = @transform_4, window_bounds = array<i64: 1, 128, 256>}]} {
    %c0 = arith.constant 0 : index
    %c0_0 = arith.constant 0 : index
    %0 = vector.load %arg3[%c0, %c0_0] : memref<128x4xf32, #tpu.memory_space<vmem>>, vector<128x4xf32>
    %c0_1 = arith.constant 0 : index
    %c0_2 = arith.constant 0 : index
    %c0_3 = arith.constant 0 : index
    %1 = vector.load %arg2[%c0_1, %c0_2, %c0_3] : memref<1x4x256xf32, #tpu.memory_space<vmem>>, vector<1x4x256xf32>
    %2 = vector.shape_cast %1 : vector<1x4x256xf32> to vector<4x256xf32>
    %cst = arith.constant dense<0.000000e+00> : vector<128x256xf32>
    %3 = tpu.matmul %0, %2, %cst {dimension_numbers = #tpu.dot_dimension_numbers<[1], [0], [0], [1], [0, 0, 1, 1], [], []>} : vector<128x4xf32>, vector<4x256xf32>, vector<128x256xf32> -> vector<128x256xf32>
    %c0_4 = arith.constant 0 : index
    %c0_5 = arith.constant 0 : index
    %4 = vector.load %arg4[%c0_4, %c0_5] : memref<128x1xf32, #tpu.memory_space<vmem>>, vector<128x1xf32>
    %5 = vector.broadcast %4 : vector<128x1xf32> to vector<128x256xf32>
    %6 = arith.mulf %3, %5 : vector<128x256xf32>
    %c0_6 = arith.constant 0 : index
    %c0_7 = arith.constant 0 : index
    %7 = vector.load %arg5[%c0_6, %c0_7] : memref<128x1xf32, #tpu.memory_space<vmem>>, vector<128x1xf32>
    %8 = vector.broadcast %7 : vector<128x1xf32> to vector<128x256xf32>
    %9 = arith.addf %6, %8 : vector<128x256xf32>
    %c0_8 = arith.constant 0 : index
    %c0_9 = arith.constant 0 : index
    %c0_10 = arith.constant 0 : index
    %10 = vector.load %arg6[%c0_8, %c0_9, %c0_10] : memref<1x128x256xf32, #tpu.memory_space<vmem>>, vector<1x128x256xf32>
    %11 = vector.shape_cast %10 : vector<1x128x256xf32> to vector<128x256xf32>
    %12 = vector.shape_cast %9 : vector<128x256xf32> to vector<1x128x256xf32>
    tpu.vector_store %arg6[%c0_8, %c0_9, %c0_10], %12 {strides = array<i32>} : memref<1x128x256xf32, #tpu.memory_space<vmem>>, vector<1x128x256xf32>,
    return
  }
  func.func @transform_0(%arg0: i32, %arg1: i32) -> (i32, i32, i32) {
    %c0_i32 = arith.constant 0 : i32
    %c0_i32_0 = arith.constant 0 : i32
    return %arg0, %c0_i32, %arg1 : i32, i32, i32
  }
  func.func @transform_1(%arg0: i32, %arg1: i32) -> (i32, i32) {
    %c0_i32 = arith.constant 0 : i32
    %c0_i32_0 = arith.constant 0 : i32
    %c0_i32_1 = arith.constant 0 : i32
    return %c0_i32, %c0_i32_0 : i32, i32
  }
  func.func @transform_2(%arg0: i32, %arg1: i32) -> (i32, i32) {
    %c0_i32 = arith.constant 0 : i32
    %c0_i32_0 = arith.constant 0 : i32
    %c0_i32_1 = arith.constant 0 : i32
    return %c0_i32, %c0_i32_0 : i32, i32
  }
  func.func @transform_3(%arg0: i32, %arg1: i32) -> (i32, i32) {
    %c0_i32 = arith.constant 0 : i32
    %c0_i32_0 = arith.constant 0 : i32
    %c0_i32_1 = arith.constant 0 : i32
    return %c0_i32, %c0_i32_0 : i32, i32
  }
  func.func @transform_4(%arg0: i32, %arg1: i32) -> (i32, i32, i32) {
    %c0_i32 = arith.constant 0 : i32
    %c0_i32_0 = arith.constant 0 : i32
    return %arg0, %c0_i32, %arg1 : i32, i32, i32
  }
}

</mosaic_0001>

<llo_original>
// kernel: tpu_custom_call.1
$region0: #{tpu_custom_call.1}
  #allocation0 [shape = 'u32[]', space=smem, size = 0x4, offset = 0x4, fixed_abs, tag = 'smem constant byte address 0x4 - core index']
  #allocation1 [shape = 'u32[72,128]{1,0:T(1,128)}', space=vmem, size = 0x9000, scoped, tag = 'internal scratch']
  %s0 = inlined_call_operand.vmem [shape: f32[2,4,256], index: 0, kind: input, shape index: {}]
  %s1 = inlined_call_operand.vmem [shape: f32[128,4], index: 1, kind: input, shape index: {}]
  %s2 = inlined_call_operand.vmem [shape: f32[128,1], index: 2, kind: input, shape index: {}]
  %s3 = inlined_call_operand.vmem [shape: f32[128,1], index: 3, kind: input, shape index: {}]
  %s4 = inlined_call_operand.hbm [shape: f32[2,128,256], index: 4, kind: output, shape index: {}]
  %s5 = sld [smem:[#allocation0]]
  $region49: #{tpu_custom_call.1} parent=0
    _
  %s7 = ssub.s32 1, %s5
  %s8 = scalar_select 0, %s7, %s5
  $region1: #{tpu_custom_call.1} parent=0
    #allocation2 [shape = 'u8[262144]{0}', space=vmem, size = 0x40000, scoped, tag = 'output window, operand 0']
    #allocation3 [shape = 's32[2]{0}', space=sflag, size = 0x8, scoped, tag = 'scoped memory for tpu_custom_call.1']
    %9 = vsyncpa [#allocation3], 0
    %s10 = scalar_lea.sflag [#allocation3], 1
    %11 = vsyncpa %s10, 0
    loop: start=0, step=1, limit=4
    $region2: #{tpu_custom_call.1} parent=1 // loop_pre_header
      _
    $region3: #{tpu_custom_call.1} parent=1 // loop_header
      %s13 = sphi 0, %s17
      %p14 = scmp.ge.s32.totalorder %s13, 4
      %s20 = sphi 0, %s32
      %s21 = sphi 0, %s28
      %s22 = sphi 0, %s20
      %s23 = sphi 0, %s21
      %s24 = sphi 0, %s22
      %s25 = sphi 0, %s23
      %s37 = sphi 0, %s39
      %s40 = sphi 0, %s37
      %s41 = sphi 0, %s40
      %s57 = sphi 0, %s41
      %s61 = sphi 0, %s61
      %s63 = sphi 0, %s61
      %s64 = sphi 0, %s63
      %s78 = sphi 0, %s64
      %s82 = sphi 0, %s82
      %s84 = sphi 0, %s82
      %s85 = sphi 0, %s84
      %s99 = sphi 0, %s85
      %s103 = sphi 0, %s103
      %s105 = sphi 0, %s103
      %s106 = sphi 0, %s105
      %s120 = sphi 0, %s106
      %s128 = sphi 0, %s130
      %s131 = sphi 0, %s128
      %s132 = sphi 0, %s131
      %s148 = sphi 0, %s132
    $region4: #{tpu_custom_call.1} parent=1 // loop_header_branch
      %16 = sbr.rel (%p14) target = $region8
    $region5: #{tpu_custom_call.1} parent=1 // loop_body
      %s18 = ssub.s32 %s13, 1
      %s19 = ssub.s32 %s13, 2
      %s26 = sadd.s32 1, %s21
      %p27 = scmp.ge.s32.totalorder %s26, 1
      %s28 = scalar_select %p27, 0, %s26
      %s29 = sadd.s32 1, %s20
      %s30 = scalar_select %p27, %s29, %s20
      %p31 = scmp.ge.s32.totalorder %s30, 2
      %s32 = scalar_select %p31, 0, %s30
      %s33 = ssub.s32 %s20, %s32
      %s34 = ssub.s32 %s21, %s28
      %s35 = sor.u32 %s33, %s34
      %p36 = scmp.eq.s32.totalorder %s35, 0
      %s38 = sadd.s32 %s37, 1
      %s39 = scalar_select %p36, %s37, %s38
      %p42 = pneg %p36
      %p43 = scmp.eq.s32.totalorder %s13, 1
      %p44 = por %p42, %p43
      %p45 = scmp.ne.s32.totalorder %s37, %s40
      %p46 = scmp.eq.s32.totalorder %s13, 0
      %p47 = por %p45, %p46
      %p48 = scmp.ne.s32.totalorder %s37, %s40
      %p49 = scmp.eq.s32.totalorder %s18, 1
      %p50 = por %p48, %p49
      %p51 = scmp.ne.s32.totalorder %s40, %s41
      %p52 = scmp.eq.s32.totalorder %s18, 0
      %p53 = por %p51, %p52
      %p54 = scmp.ne.s32.totalorder %s40, %s41
      %p55 = scmp.eq.s32.totalorder %s19, 1
      %p56 = por %p54, %p55
      %p58 = scmp.ne.s32.totalorder %s41, %s57
      %p59 = scmp.eq.s32.totalorder %s19, 0
      %p60 = por %p58, %p59
      %s62 = sadd.s32 %s61, 1
      %p65 = scmp.eq.s32.totalorder %s13, 1
      %p66 = scmp.ne.s32.totalorder %s61, %s63
      %p67 = scmp.eq.s32.totalorder %s13, 0
      %p68 = por %p66, %p67
      %p69 = scmp.ne.s32.totalorder %s61, %s63
      %p70 = scmp.eq.s32.totalorder %s18, 1
      %p71 = por %p69, %p70
      %p72 = scmp.ne.s32.totalorder %s63, %s64
      %p73 = scmp.eq.s32.totalorder %s18, 0
      %p74 = por %p72, %p73
      %p75 = scmp.ne.s32.totalorder %s63, %s64
      %p76 = scmp.eq.s32.totalorder %s19, 1
      %p77 = por %p75, %p76
      %p79 = scmp.ne.s32.totalorder %s64, %s78
      %p80 = scmp.eq.s32.totalorder %s19, 0
      %p81 = por %p79, %p80
      %s83 = sadd.s32 %s82, 1
      %p86 = scmp.eq.s32.totalorder %s13, 1
      %p87 = scmp.ne.s32.totalorder %s82, %s84
      %p88 = scmp.eq.s32.totalorder %s13, 0
      %p89 = por %p87, %p88
      %p90 = scmp.ne.s32.totalorder %s82, %s84
      %p91 = scmp.eq.s32.totalorder %s18, 1
      %p92 = por %p90, %p91
      %p93 = scmp.ne.s32.totalorder %s84, %s85
      %p94 = scmp.eq.s32.totalorder %s18, 0
      %p95 = por %p93, %p94
      %p96 = scmp.ne.s32.totalorder %s84, %s85
      %p97 = scmp.eq.s32.totalorder %s19, 1
      %p98 = por %p96, %p97
      %p100 = scmp.ne.s32.totalorder %s85, %s99
      %p101 = scmp.eq.s32.totalorder %s19, 0
      %p102 = por %p100, %p101
      %s104 = sadd.s32 %s103, 1
      %p107 = scmp.eq.s32.totalorder %s13, 1
      %p108 = scmp.ne.s32.totalorder %s103, %s105
      %p109 = scmp.eq.s32.totalorder %s13, 0
      %p110 = por %p108, %p109
      %p111 = scmp.ne.s32.totalorder %s103, %s105
      %p112 = scmp.eq.s32.totalorder %s18, 1
      %p113 = por %p111, %p112
      %p114 = scmp.ne.s32.totalorder %s105, %s106
      %p115 = scmp.eq.s32.totalorder %s18, 0
      %p116 = por %p114, %p115
      %p117 = scmp.ne.s32.totalorder %s105, %s106
      %p118 = scmp.eq.s32.totalorder %s19, 1
      %p119 = por %p117, %p118
      %p121 = scmp.ne.s32.totalorder %s106, %s120
      %p122 = scmp.eq.s32.totalorder %s19, 0
      %p123 = por %p121, %p122
      %s124 = ssub.s32 %s20, %s32
      %s125 = ssub.s32 %s21, %s28
      %s126 = sor.u32 %s124, %s125
      %p127 = scmp.eq.s32.totalorder %s126, 0
      %s129 = sadd.s32 %s128, 1
      %s130 = scalar_select %p127, %s128, %s129
      %p133 = pneg %p127
      %p134 = scmp.eq.s32.totalorder %s13, 1
      %p135 = por %p133, %p134
      %p136 = scmp.ne.s32.totalorder %s128, %s131
      %p137 = scmp.eq.s32.totalorder %s13, 0
      %p138 = por %p136, %p137
      %p139 = scmp.ne.s32.totalorder %s128, %s131
      %p140 = scmp.eq.s32.totalorder %s18, 1
      %p141 = por %p139, %p140
      %p142 = scmp.ne.s32.totalorder %s131, %s132
      %p143 = scmp.eq.s32.totalorder %s18, 0
      %p144 = por %p142, %p143
      %p145 = scmp.ne.s32.totalorder %s131, %s132
      %p146 = scmp.eq.s32.totalorder %s19, 1
      %p147 = por %p145, %p146
      %p149 = scmp.ne.s32.totalorder %s132, %s148
      %p150 = scmp.eq.s32.totalorder %s19, 0
      %p151 = por %p149, %p150
      %p152 = scmp.le.s32.totalorder 1, %s13
      %p153 = scmp.lt.s32.totalorder %s13, 3
      %p154 = pnand %p152, %p153
      %p155 = pneg %p154
      // Predicated region
      $region9: #{tpu_custom_call.1} parent=5 // pred_check
        _
      $region10: #{tpu_custom_call.1} parent=5 // pred_check_branch
        %157 = sbr.rel (%p154) target = $region12
      $region11: #{tpu_custom_call.1} parent=5 // pred_region
        %s158 = ssub.s32 %s13, 1
        // Predicated region
        $region13: #{tpu_custom_call.1} parent=11 // pred_check
          %p159 = pneg %p74
        $region14: #{tpu_custom_call.1} parent=11 // pred_check_branch
          %161 = sbr.rel (%p159) target = $region16
        $region15: #{tpu_custom_call.1} parent=11 // pred_region
          _
        $region16: #{tpu_custom_call.1} parent=11 // pred_fallthru
          _
        // Predicated region
        $region17: #{tpu_custom_call.1} parent=11 // pred_check
          %p162 = pneg %p95
        $region18: #{tpu_custom_call.1} parent=11 // pred_check_branch
          %164 = sbr.rel (%p162) target = $region20
        $region19: #{tpu_custom_call.1} parent=11 // pred_region
          _
        $region20: #{tpu_custom_call.1} parent=11 // pred_fallthru
          _
        // Predicated region
        $region21: #{tpu_custom_call.1} parent=11 // pred_check
          %p165 = pneg %p116
        $region22: #{tpu_custom_call.1} parent=11 // pred_check_branch
          %167 = sbr.rel (%p165) target = $region24
        $region23: #{tpu_custom_call.1} parent=11 // pred_region
          _
        $region24: #{tpu_custom_call.1} parent=11 // pred_fallthru
          _
      $region12: #{tpu_custom_call.1} parent=5 // pred_fallthru
        _
      %p168 = scmp.lt.s32.totalorder %s13, 2
      // Predicated region
      $region25: #{tpu_custom_call.1} parent=5 // pred_check
        %p169 = pneg %p168
      $region26: #{tpu_custom_call.1} parent=5 // pred_check_branch
        %171 = sbr.rel (%p169) target = $region28
      $region27: #{tpu_custom_call.1} parent=5 // pred_region
        // Predicated region
        $region29: #{tpu_custom_call.1} parent=27 // pred_check
          %p172 = pneg %p47
        $region30: #{tpu_custom_call.1} parent=27 // pred_check_branch
          %174 = sbr.rel (%p172) target = $region32
        $region31: #{tpu_custom_call.1} parent=27 // pred_region
          %s175 = smul.u32 2, %s21
          %p176 = scmp.lt.s32.totalorder %s20, 1
          %s177 = scalar_select %p176, %s20, 1
          %p178 = scmp.lt.s32.totalorder %s175, 1
          %s179 = scalar_select %p178, %s175, 1
          %s180 = smul.addr %s177, 2
          %s181 = sadd.s32 %s179, %s180
          %s182 = smul.addr %s181, 4
          %s183 = scalar_lea.vmem %s0, %s182
          %s184 = smul.u32 2, %s21
        $region32: #{tpu_custom_call.1} parent=27 // pred_fallthru
          _
      $region28: #{tpu_custom_call.1} parent=5 // pred_fallthru
        _
      %p185 = scmp.le.s32.totalorder 1, %s13
      %p186 = scmp.lt.s32.totalorder %s13, 3
      %p187 = pnand %p185, %p186
      %p188 = pneg %p187
      // Predicated region
      $region33: #{tpu_custom_call.1} parent=5 // pred_check
        _
      $region34: #{tpu_custom_call.1} parent=5 // pred_check_branch
        %190 = sbr.rel (%p187) target = $region36
      $region35: #{tpu_custom_call.1} parent=5 // pred_region
        %s191 = ssub.s32 %s13, 1
        %s192 = smul.u32 2, %s23
        %p193 = scmp.lt.s32.totalorder %s22, 1
        %s194 = scalar_select %p193, %s22, 1
        %p195 = scmp.lt.s32.totalorder %s192, 1
        %s196 = scalar_select %p195, %s192, 1
        %s197 = smul.addr %s194, 2
        %s198 = sadd.s32 %s196, %s197
        %s199 = smul.addr %s198, 4
        %s200 = scalar_lea.vmem %s0, %s199
        %p201 = pneg %p53
        %p202 = pneg %p50
        %p203 = pneg %p74
        %p204 = pneg %p71
        %p205 = pneg %p95
        %p206 = pneg %p92
        %p207 = pneg %p116
        %p208 = pneg %p113
        %p209 = pneg %p144
        %p210 = pneg %p141
        %s211 = sand.u32 %s131, 1
        %s212 = scalar_lea.sflag [#allocation3], %s211
        %s213 = sand.u32 %s131, 1
        %s214 = smul.addr %s213, 256
        %s215 = scalar_lea.vmem [#allocation2], %s214
        %s216 = smul.u32 2, %s23
        %p217 = scmp.lt.s32.totalorder %s22, 1
        %s218 = scalar_select %p217, %s22, 1
        %p219 = scmp.lt.s32.totalorder %s216, 1
        %s220 = scalar_select %p219, %s216, 1
        %s221 = smul.addr %s218, 2
        %s222 = sadd.s32 %s220, %s221
        %s223 = smul.addr %s222, 4
        %s224 = scalar_lea.vmem %s0, %s223
        %s225 = smul.u32 2, %s23
        %s226 = smul.u32 2, %s23
        %v227 = vld [vmem:[%s1] sm:$0xff]
        %v228 = vld [vmem:[%s1 + $0x8] sm:$0xff]
        %v229 = vld [vmem:[%s1 + $0x10] sm:$0xff]
        %v230 = vld [vmem:[%s1 + $0x18] sm:$0xff]
        %v231 = vld [vmem:[%s1 + $0x20] sm:$0xff]
        %v232 = vld [vmem:[%s1 + $0x28] sm:$0xff]
        %v233 = vld [vmem:[%s1 + $0x30] sm:$0xff]
        %v234 = vld [vmem:[%s1 + $0x38] sm:$0xff]
        %v235 = vld [vmem:[%s1 + $0x40] sm:$0xff]
        %v236 = vld [vmem:[%s1 + $0x48] sm:$0xff]
        %v237 = vld [vmem:[%s1 + $0x50] sm:$0xff]
        %v238 = vld [vmem:[%s1 + $0x58] sm:$0xff]
        %v239 = vld [vmem:[%s1 + $0x60] sm:$0xff]
        %v240 = vld [vmem:[%s1 + $0x68] sm:$0xff]
        %v241 = vld [vmem:[%s1 + $0x70] sm:$0xff]
        %v242 = vld [vmem:[%s1 + $0x78] sm:$0xff]
        %v243 = vld [vmem:[%s224] sm:$0xff]
        %245 = vst [vmem:[#allocation1] ss:$2 sm:$0xff] %v243
        %v246 = vld.sshfl [vmem:[#allocation1] sm:$0xff pattern:$0x75316420]
        %v247 = vld.sshfl [vmem:[#allocation1 + $0x8] sm:$0xff pattern:$0x75316420]
        %vm248 = vcmask 31744
        %v250 = vsel %vm248, %v227, 0
        %v253 = vsel %vm248, %v228, 0
        %v256 = vsel %vm248, %v229, 0
        %v259 = vsel %vm248, %v230, 0
        %v262 = vsel %vm248, %v231, 0
        %v265 = vsel %vm248, %v232, 0
        %v268 = vsel %vm248, %v233, 0
        %v271 = vsel %vm248, %v234, 0
        %v274 = vsel %vm248, %v235, 0
        %v277 = vsel %vm248, %v236, 0
        %v280 = vsel %vm248, %v237, 0
        %v283 = vsel %vm248, %v238, 0
        %v286 = vsel %vm248, %v239, 0
        %v289 = vsel %vm248, %v240, 0
        %v292 = vsel %vm248, %v241, 0
        %v295 = vsel %vm248, %v242, 0
        %vm297 = vcmask 1043456
        %v298 = vsel %vm297, %v246, 0
        %v300 = vsel %vm297, %v247, 0
        %302 = vmatpush.msra.mxu0 0.0
        %303 = vmatpush.msra.mxu0 0.0
        %304 = vmatpush.msra.mxu0 0.0
        %305 = vmatpush.msra.mxu0 0.0
        %306 = vmatpush.msra.mxu0 0.0
        %307 = vmatpush.msra.mxu0 0.0
        %308 = vmatpush.msra.mxu0 0.0
        %309 = vmatpush.msra.mxu0 0.0
        %310 = vmatpush.msra.mxu0 0.0
        %311 = vmatpush.msra.mxu0 0.0
        %312 = vmatpush.msra.mxu0 0.0
        %313 = vmatpush.msra.mxu0 0.0
        %314 = vmatpush.msra.mxu0 0.0
        %315 = vmatpush.msra.mxu0 0.0
        %316 = vmatpush.msra.mxu0 0.0
        %317 = vmatpush.msra.mxu0 %v298
        %318 = vmatmul.f32.gmra.mxu0 %v250
        %v319 = vpop.f32.mrf.mxu0
        %v320 = vadd.f32 0.0, %v319
        %321 = vmatmul.f32.gmra.mxu0 %v253
        %v322 = vpop.f32.mrf.mxu0
        %v323 = vadd.f32 0.0, %v322
        %324 = vmatmul.f32.gmra.mxu0 %v256
        %v325 = vpop.f32.mrf.mxu0
        %v326 = vadd.f32 0.0, %v325
        %327 = vmatmul.f32.gmra.mxu0 %v259
        %v328 = vpop.f32.mrf.mxu0
        %v329 = vadd.f32 0.0, %v328
        %330 = vmatmul.f32.gmra.mxu0 %v262
        %v331 = vpop.f32.mrf.mxu0
        %v332 = vadd.f32 0.0, %v331
        %333 = vmatmul.f32.gmra.mxu0 %v265
        %v334 = vpop.f32.mrf.mxu0
        %v335 = vadd.f32 0.0, %v334
        %336 = vmatmul.f32.gmra.mxu0 %v268
        %v337 = vpop.f32.mrf.mxu0
        %v338 = vadd.f32 0.0, %v337
        %339 = vmatmul.f32.gmra.mxu0 %v271
        %v340 = vpop.f32.mrf.mxu0
        %v341 = vadd.f32 0.0, %v340
        %342 = vmatmul.f32.gmra.mxu0 %v274
        %v343 = vpop.f32.mrf.mxu0
        %v344 = vadd.f32 0.0, %v343
        %345 = vmatmul.f32.gmra.mxu0 %v277
        %v346 = vpop.f32.mrf.mxu0
        %v347 = vadd.f32 0.0, %v346
        %348 = vmatmul.f32.gmra.mxu0 %v280
        %v349 = vpop.f32.mrf.mxu0
        %v350 = vadd.f32 0.0, %v349
        %351 = vmatmul.f32.gmra.mxu0 %v283
        %v352 = vpop.f32.mrf.mxu0
        %v353 = vadd.f32 0.0, %v352
        %354 = vmatmul.f32.gmra.mxu0 %v286
        %v355 = vpop.f32.mrf.mxu0
        %v356 = vadd.f32 0.0, %v355
        %357 = vmatmul.f32.gmra.mxu0 %v289
        %v358 = vpop.f32.mrf.mxu0
        %v359 = vadd.f32 0.0, %v358
        %360 = vmatmul.f32.gmra.mxu0 %v292
        %v361 = vpop.f32.mrf.mxu0
        %v362 = vadd.f32 0.0, %v361
        %363 = vmatmul.f32.gmra.mxu0 %v295
        %v364 = vpop.f32.mrf.mxu0
        %v365 = vadd.f32 0.0, %v364
        %366 = vdwg.mxu0
        %367 = vmatpush.msra.mxu0 0.0
        %368 = vmatpush.msra.mxu0 0.0
        %369 = vmatpush.msra.mxu0 0.0
        %370 = vmatpush.msra.mxu0 0.0
        %371 = vmatpush.msra.mxu0 0.0
        %372 = vmatpush.msra.mxu0 0.0
        %373 = vmatpush.msra.mxu0 0.0
        %374 = vmatpush.msra.mxu0 0.0
        %375 = vmatpush.msra.mxu0 0.0
        %376 = vmatpush.msra.mxu0 0.0
        %377 = vmatpush.msra.mxu0 0.0
        %378 = vmatpush.msra.mxu0 0.0
        %379 = vmatpush.msra.mxu0 0.0
        %380 = vmatpush.msra.mxu0 0.0
        %381 = vmatpush.msra.mxu0 0.0
        %382 = vmatpush.msra.mxu0 %v300
        %383 = vmatmul.f32.gmra.mxu0 %v250
        %v384 = vpop.f32.mrf.mxu0
        %v385 = vadd.f32 0.0, %v384
        %386 = vmatmul.f32.gmra.mxu0 %v253
        %v387 = vpop.f32.mrf.mxu0
        %v388 = vadd.f32 0.0, %v387
        %389 = vmatmul.f32.gmra.mxu0 %v256
        %v390 = vpop.f32.mrf.mxu0
        %v391 = vadd.f32 0.0, %v390
        %392 = vmatmul.f32.gmra.mxu0 %v259
        %v393 = vpop.f32.mrf.mxu0
        %v394 = vadd.f32 0.0, %v393
        %395 = vmatmul.f32.gmra.mxu0 %v262
        %v396 = vpop.f32.mrf.mxu0
        %v397 = vadd.f32 0.0, %v396
        %398 = vmatmul.f32.gmra.mxu0 %v265
        %v399 = vpop.f32.mrf.mxu0
        %v400 = vadd.f32 0.0, %v399
        %401 = vmatmul.f32.gmra.mxu0 %v268
        %v402 = vpop.f32.mrf.mxu0
        %v403 = vadd.f32 0.0, %v402
        %404 = vmatmul.f32.gmra.mxu0 %v271
        %v405 = vpop.f32.mrf.mxu0
        %v406 = vadd.f32 0.0, %v405
        %407 = vmatmul.f32.gmra.mxu0 %v274
        %v408 = vpop.f32.mrf.mxu0
        %v409 = vadd.f32 0.0, %v408
        %410 = vmatmul.f32.gmra.mxu0 %v277
        %v411 = vpop.f32.mrf.mxu0
        %v412 = vadd.f32 0.0, %v411
        %413 = vmatmul.f32.gmra.mxu0 %v280
        %v414 = vpop.f32.mrf.mxu0
        %v415 = vadd.f32 0.0, %v414
        %416 = vmatmul.f32.gmra.mxu0 %v283
        %v417 = vpop.f32.mrf.mxu0
        %v418 = vadd.f32 0.0, %v417
        %419 = vmatmul.f32.gmra.mxu0 %v286
        %v420 = vpop.f32.mrf.mxu0
        %v421 = vadd.f32 0.0, %v420
        %422 = vmatmul.f32.gmra.mxu0 %v289
        %v423 = vpop.f32.mrf.mxu0
        %v424 = vadd.f32 0.0, %v423
        %425 = vmatmul.f32.gmra.mxu0 %v292
        %v426 = vpop.f32.mrf.mxu0
        %v427 = vadd.f32 0.0, %v426
        %428 = vmatmul.f32.gmra.mxu0 %v295
        %v429 = vpop.f32.mrf.mxu0
        %v430 = vadd.f32 0.0, %v429
        %431 = vdwg.mxu0
        %v432 = vld [vmem:[%s2] sm:$0xff]
        %v433 = vld [vmem:[%s2 + $0x8] sm:$0xff]
        %v434 = vld [vmem:[%s2 + $0x10] sm:$0xff]
        %v435 = vld [vmem:[%s2 + $0x18] sm:$0xff]
        %v436 = vld [vmem:[%s2 + $0x20] sm:$0xff]
        %v437 = vld [vmem:[%s2 + $0x28] sm:$0xff]
        %v438 = vld [vmem:[%s2 + $0x30] sm:$0xff]
        %v439 = vld [vmem:[%s2 + $0x38] sm:$0xff]
        %v440 = vld [vmem:[%s2 + $0x40] sm:$0xff]
        %v441 = vld [vmem:[%s2 + $0x48] sm:$0xff]
        %v442 = vld [vmem:[%s2 + $0x50] sm:$0xff]
        %v443 = vld [vmem:[%s2 + $0x58] sm:$0xff]
        %v444 = vld [vmem:[%s2 + $0x60] sm:$0xff]
        %v445 = vld [vmem:[%s2 + $0x68] sm:$0xff]
        %v446 = vld [vmem:[%s2 + $0x70] sm:$0xff]
        %v447 = vld [vmem:[%s2 + $0x78] sm:$0xff]
        %449 = vset.pattern.permute.xlu0 0
        %450 = vperm.xlu0 %449, %v432
        %v451 = vpop.permute.xlu0 %450
        %454 = vset.pattern.permute.xlu0 0
        %455 = vperm.xlu0 %454, %v433
        %v456 = vpop.permute.xlu0 %455
        %459 = vset.pattern.permute.xlu0 0
        %460 = vperm.xlu0 %459, %v434
        %v461 = vpop.permute.xlu0 %460
        %464 = vset.pattern.permute.xlu0 0
        %465 = vperm.xlu0 %464, %v435
        %v466 = vpop.permute.xlu0 %465
        %469 = vset.pattern.permute.xlu0 0
        %470 = vperm.xlu0 %469, %v436
        %v471 = vpop.permute.xlu0 %470
        %474 = vset.pattern.permute.xlu0 0
        %475 = vperm.xlu0 %474, %v437
        %v476 = vpop.permute.xlu0 %475
        %479 = vset.pattern.permute.xlu0 0
        %480 = vperm.xlu0 %479, %v438
        %v481 = vpop.permute.xlu0 %480
        %484 = vset.pattern.permute.xlu0 0
        %485 = vperm.xlu0 %484, %v439
        %v486 = vpop.permute.xlu0 %485
        %489 = vset.pattern.permute.xlu0 0
        %490 = vperm.xlu0 %489, %v440
        %v491 = vpop.permute.xlu0 %490
        %494 = vset.pattern.permute.xlu0 0
        %495 = vperm.xlu0 %494, %v441
        %v496 = vpop.permute.xlu0 %495
        %499 = vset.pattern.permute.xlu0 0
        %500 = vperm.xlu0 %499, %v442
        %v501 = vpop.permute.xlu0 %500
        %504 = vset.pattern.permute.xlu0 0
        %505 = vperm.xlu0 %504, %v443
        %v506 = vpop.permute.xlu0 %505
        %509 = vset.pattern.permute.xlu0 0
        %510 = vperm.xlu0 %509, %v444
        %v511 = vpop.permute.xlu0 %510
        %514 = vset.pattern.permute.xlu0 0
        %515 = vperm.xlu0 %514, %v445
        %v516 = vpop.permute.xlu0 %515
        %519 = vset.pattern.permute.xlu0 0
        %520 = vperm.xlu0 %519, %v446
        %v521 = vpop.permute.xlu0 %520
        %524 = vset.pattern.permute.xlu0 0
        %525 = vperm.xlu0 %524, %v447
        %v526 = vpop.permute.xlu0 %525
        %v528 = vmul.f32 %v320, %v451
        %v529 = vmul.f32 %v385, %v451
        %v530 = vmul.f32 %v323, %v456
        %v531 = vmul.f32 %v388, %v456
        %v532 = vmul.f32 %v326, %v461
        %v533 = vmul.f32 %v391, %v461
        %v534 = vmul.f32 %v329, %v466
        %v535 = vmul.f32 %v394, %v466
        %v536 = vmul.f32 %v332, %v471
        %v537 = vmul.f32 %v397, %v471
        %v538 = vmul.f32 %v335, %v476
        %v539 = vmul.f32 %v400, %v476
        %v540 = vmul.f32 %v338, %v481
        %v541 = vmul.f32 %v403, %v481
        %v542 = vmul.f32 %v341, %v486
        %v543 = vmul.f32 %v406, %v486
        %v544 = vmul.f32 %v344, %v491
        %v545 = vmul.f32 %v409, %v491
        %v546 = vmul.f32 %v347, %v496
        %v547 = vmul.f32 %v412, %v496
        %v548 = vmul.f32 %v350, %v501
        %v549 = vmul.f32 %v415, %v501
        %v550 = vmul.f32 %v353, %v506
        %v551 = vmul.f32 %v418, %v506
        %v552 = vmul.f32 %v356, %v511
        %v553 = vmul.f32 %v421, %v511
        %v554 = vmul.f32 %v359, %v516
        %v555 = vmul.f32 %v424, %v516
        %v556 = vmul.f32 %v362, %v521
        %v557 = vmul.f32 %v427, %v521
        %v558 = vmul.f32 %v365, %v526
        %v559 = vmul.f32 %v430, %v526
        %v560 = vld [vmem:[%s3] sm:$0xff]
        %v561 = vld [vmem:[%s3 + $0x8] sm:$0xff]
        %v562 = vld [vmem:[%s3 + $0x10] sm:$0xff]
        %v563 = vld [vmem:[%s3 + $0x18] sm:$0xff]
        %v564 = vld [vmem:[%s3 + $0x20] sm:$0xff]
        %v565 = vld [vmem:[%s3 + $0x28] sm:$0xff]
        %v566 = vld [vmem:[%s3 + $0x30] sm:$0xff]
        %v567 = vld [vmem:[%s3 + $0x38] sm:$0xff]
        %v568 = vld [vmem:[%s3 + $0x40] sm:$0xff]
        %v569 = vld [vmem:[%s3 + $0x48] sm:$0xff]
        %v570 = vld [vmem:[%s3 + $0x50] sm:$0xff]
        %v571 = vld [vmem:[%s3 + $0x58] sm:$0xff]
        %v572 = vld [vmem:[%s3 + $0x60] sm:$0xff]
        %v573 = vld [vmem:[%s3 + $0x68] sm:$0xff]
        %v574 = vld [vmem:[%s3 + $0x70] sm:$0xff]
        %v575 = vld [vmem:[%s3 + $0x78] sm:$0xff]
        %577 = vset.pattern.permute.xlu0 0
        %578 = vperm.xlu0 %577, %v560
        %v579 = vpop.permute.xlu0 %578
        %582 = vset.pattern.permute.xlu0 0
        %583 = vperm.xlu0 %582, %v561
        %v584 = vpop.permute.xlu0 %583
        %587 = vset.pattern.permute.xlu0 0
        %588 = vperm.xlu0 %587, %v562
        %v589 = vpop.permute.xlu0 %588
        %592 = vset.pattern.permute.xlu0 0
        %593 = vperm.xlu0 %592, %v563
        %v594 = vpop.permute.xlu0 %593
        %597 = vset.pattern.permute.xlu0 0
        %598 = vperm.xlu0 %597, %v564
        %v599 = vpop.permute.xlu0 %598
        %602 = vset.pattern.permute.xlu0 0
        %603 = vperm.xlu0 %602, %v565
        %v604 = vpop.permute.xlu0 %603
        %607 = vset.pattern.permute.xlu0 0
        %608 = vperm.xlu0 %607, %v566
        %v609 = vpop.permute.xlu0 %608
        %612 = vset.pattern.permute.xlu0 0
        %613 = vperm.xlu0 %612, %v567
        %v614 = vpop.permute.xlu0 %613
        %617 = vset.pattern.permute.xlu0 0
        %618 = vperm.xlu0 %617, %v568
        %v619 = vpop.permute.xlu0 %618
        %622 = vset.pattern.permute.xlu0 0
        %623 = vperm.xlu0 %622, %v569
        %v624 = vpop.permute.xlu0 %623
        %627 = vset.pattern.permute.xlu0 0
        %628 = vperm.xlu0 %627, %v570
        %v629 = vpop.permute.xlu0 %628
        %632 = vset.pattern.permute.xlu0 0
        %633 = vperm.xlu0 %632, %v571
        %v634 = vpop.permute.xlu0 %633
        %637 = vset.pattern.permute.xlu0 0
        %638 = vperm.xlu0 %637, %v572
        %v639 = vpop.permute.xlu0 %638
        %642 = vset.pattern.permute.xlu0 0
        %643 = vperm.xlu0 %642, %v573
        %v644 = vpop.permute.xlu0 %643
        %647 = vset.pattern.permute.xlu0 0
        %648 = vperm.xlu0 %647, %v574
        %v649 = vpop.permute.xlu0 %648
        %652 = vset.pattern.permute.xlu0 0
        %653 = vperm.xlu0 %652, %v575
        %v654 = vpop.permute.xlu0 %653
        %v656 = vadd.f32 %v528, %v579
        %v657 = vadd.f32 %v529, %v579
        %v658 = vadd.f32 %v530, %v584
        %v659 = vadd.f32 %v531, %v584
        %v660 = vadd.f32 %v532, %v589
        %v661 = vadd.f32 %v533, %v589
        %v662 = vadd.f32 %v534, %v594
        %v663 = vadd.f32 %v535, %v594
        %v664 = vadd.f32 %v536, %v599
        %v665 = vadd.f32 %v537, %v599
        %v666 = vadd.f32 %v538, %v604
        %v667 = vadd.f32 %v539, %v604
        %v668 = vadd.f32 %v540, %v609
        %v669 = vadd.f32 %v541, %v609
        %v670 = vadd.f32 %v542, %v614
        %v671 = vadd.f32 %v543, %v614
        %v672 = vadd.f32 %v544, %v619
        %v673 = vadd.f32 %v545, %v619
        %v674 = vadd.f32 %v546, %v624
        %v675 = vadd.f32 %v547, %v624
        %v676 = vadd.f32 %v548, %v629
        %v677 = vadd.f32 %v549, %v629
        %v678 = vadd.f32 %v550, %v634
        %v679 = vadd.f32 %v551, %v634
        %v680 = vadd.f32 %v552, %v639
        %v681 = vadd.f32 %v553, %v639
        %v682 = vadd.f32 %v554, %v644
        %v683 = vadd.f32 %v555, %v644
        %v684 = vadd.f32 %v556, %v649
        %v685 = vadd.f32 %v557, %v649
        %v686 = vadd.f32 %v558, %v654
        %v687 = vadd.f32 %v559, %v654
        %688 = vst [vmem:[%s215] sm:$0xff] %v656
        %689 = vst [vmem:[%s215 + $0x8] sm:$0xff] %v657
        %690 = vst [vmem:[%s215 + $0x10] sm:$0xff] %v658
        %691 = vst [vmem:[%s215 + $0x18] sm:$0xff] %v659
        %692 = vst [vmem:[%s215 + $0x20] sm:$0xff] %v660
        %693 = vst [vmem:[%s215 + $0x28] sm:$0xff] %v661
        %694 = vst [vmem:[%s215 + $0x30] sm:$0xff] %v662
        %695 = vst [vmem:[%s215 + $0x38] sm:$0xff] %v663
        %696 = vst [vmem:[%s215 + $0x40] sm:$0xff] %v664
        %697 = vst [vmem:[%s215 + $0x48] sm:$0xff] %v665
        %698 = vst [vmem:[%s215 + $0x50] sm:$0xff] %v666
        %699 = vst [vmem:[%s215 + $0x58] sm:$0xff] %v667
        %700 = vst [vmem:[%s215 + $0x60] sm:$0xff] %v668
        %701 = vst [vmem:[%s215 + $0x68] sm:$0xff] %v669
        %702 = vst [vmem:[%s215 + $0x70] sm:$0xff] %v670
        %703 = vst [vmem:[%s215 + $0x78] sm:$0xff] %v671
        %704 = vst [vmem:[%s215 + $0x80] sm:$0xff] %v672
        %705 = vst [vmem:[%s215 + $0x88] sm:$0xff] %v673
        %706 = vst [vmem:[%s215 + $0x90] sm:$0xff] %v674
        %707 = vst [vmem:[%s215 + $0x98] sm:$0xff] %v675
        %708 = vst [vmem:[%s215 + $0xa0] sm:$0xff] %v676
        %709 = vst [vmem:[%s215 + $0xa8] sm:$0xff] %v677
        %710 = vst [vmem:[%s215 + $0xb0] sm:$0xff] %v678
        %711 = vst [vmem:[%s215 + $0xb8] sm:$0xff] %v679
        %712 = vst [vmem:[%s215 + $0xc0] sm:$0xff] %v680
        %713 = vst [vmem:[%s215 + $0xc8] sm:$0xff] %v681
        %714 = vst [vmem:[%s215 + $0xd0] sm:$0xff] %v682
        %715 = vst [vmem:[%s215 + $0xd8] sm:$0xff] %v683
        %716 = vst [vmem:[%s215 + $0xe0] sm:$0xff] %v684
        %717 = vst [vmem:[%s215 + $0xe8] sm:$0xff] %v685
        %718 = vst [vmem:[%s215 + $0xf0] sm:$0xff] %v686
        %719 = vst [vmem:[%s215 + $0xf8] sm:$0xff] %v687
        %s720 = sand.u32 %s131, 1
        %s721 = scalar_lea.sflag [#allocation3], %s720
        %s722 = sand.u32 %s131, 1
        %s723 = smul.addr %s722, 256
        %s724 = scalar_lea.vmem [#allocation2], %s723
        // Predicated region
        $region37: #{tpu_custom_call.1} parent=35 // pred_check
          %p725 = pneg %p141
        $region38: #{tpu_custom_call.1} parent=35 // pred_check_branch
          %727 = sbr.rel (%p725) target = $region40
        $region39: #{tpu_custom_call.1} parent=35 // pred_region
          %s728 = smul.u32 2, %s23
          %730 = vsyncadd %s721, 0
          %s731 = smul.addr %s22, 32
          %s732 = sadd.s32 %s728, %s731
          %s733 = smul.addr %s732, 8
          %s734 = scalar_lea.hbm %s4, %s733
          %s735 = sshll.u32 %s724, 4
          %s736 = int_to_ptr.vmem [resolvable:$true] %s735
          %s737 = sshll.u32 %s734, 4
          %s738 = int_to_ptr.hbm [resolvable:$true] %s737
          %743 = dma.vmem_to_hbm [thread:$0]  %s736, 4096, %s738, %s721, 256, 256, 16
        $region40: #{tpu_custom_call.1} parent=35 // pred_fallthru
          _
      $region36: #{tpu_custom_call.1} parent=5 // pred_fallthru
        _
      %p744 = scmp.le.s32.totalorder 2, %s13
      // Predicated region
      $region41: #{tpu_custom_call.1} parent=5 // pred_check
        %p745 = pneg %p744
      $region42: #{tpu_custom_call.1} parent=5 // pred_check_branch
        %747 = sbr.rel (%p745) target = $region44
      $region43: #{tpu_custom_call.1} parent=5 // pred_region
        %s748 = ssub.s32 %s13, 2
        // Predicated region
        $region45: #{tpu_custom_call.1} parent=43 // pred_check
          %p749 = pneg %p147
        $region46: #{tpu_custom_call.1} parent=43 // pred_check_branch
          %751 = sbr.rel (%p749) target = $region48
        $region47: #{tpu_custom_call.1} parent=43 // pred_region
          %s752 = sand.u32 %s132, 1
          %s753 = scalar_lea.sflag [#allocation3], %s752
          %s754 = sand.u32 %s132, 1
          %s755 = smul.addr %s754, 256
          %s756 = scalar_lea.vmem [#allocation2], %s755
          %758 = dma.done %s753, 4096
        $region48: #{tpu_custom_call.1} parent=43 // pred_fallthru
          _
      $region44: #{tpu_custom_call.1} parent=5 // pred_fallthru
        _
    $region6: #{tpu_custom_call.1} parent=1 // loop_footer
      %s17 = sadd.s32 1, %s13
    $region7: #{tpu_custom_call.1} parent=1 // loop_footer_branch
      %12 = sbr.rel target = $region3
    $region8: #{tpu_custom_call.1} parent=1 // loop_exit
      _
    %759 = vsyncpa [#allocation3], 1
    %s760 = scalar_lea.sflag [#allocation3], 1
    %761 = vsyncpa %s760, 1

</llo_original>
